<compile_context>
chip_gen: v5e
topology: v5e:2x2
jax: 0.10.0
libtpu: 0.0.40
codegen_flags: <defaults>
</compile_context>

<pallas_src>
import jax
import jax.numpy as jnp
from jax.experimental import pallas as pl
from jax.experimental.pallas import tpu as pltpu


def _round_up(x, m):
    return ((x + m - 1) // m) * m


_VMEM_BUDGET_BYTES = 24 * 1024 * 1024   # explicit buffers (x double-buffer dominates)
_VMEM_LIMIT_BYTES = 48 * 1024 * 1024    # > scoped defaults, < v7x's 64 MiB physical VMEM


def _choose_batch_tile(T, B, H, itemsize):
    """Largest sublane-aligned batch tile that fits the VMEM budget.

    Budget ~= double-buffered x block (2*T*TB*H) + double-buffered out block
    (2*TB*H) + f32 score intermediates (~T*TB*H*4).  For B >= 32 the tile is
    capped so grid >= 2, letting dimension_semantics=("parallel",) shard the
    batch across both TensorCores on v7x.
    """
    if B <= 8:
        return B                                    # full-dim block: always legal
    per_row = (2 * T * H + 2 * H) * itemsize + T * H * 4
    tb = max(8, min(B, _VMEM_BUDGET_BYTES // max(per_row, 1)))
    tb = max(8, (tb // 8) * 8)
    if B >= 32:
        tb = min(tb, _round_up(pl.cdiv(B, 2), 8))   # keep >=2 grid steps (v7x megacore)
    return min(tb, 2048)


def self_attn_kernel(x_ref, wat_ref, ba_ref, vw_ref, vb_ref, o_ref):
    """One batch tile.

    x_ref:   (T, TB, H) encoder outputs for TB batch rows (seq-major HBM layout)
    wat_ref: (H, H)     attn.weight^T (pre-transposed -> MXU consumes directly)
    ba_ref:  (1, H)     attn.bias
    vw_ref:  (1, H)     v.weight
    vb_ref:  (1,)       v.bias (SMEM scalar)
    o_ref:   (TB, H)    attended context
    """
    T, TB, H = x_ref.shape
    wat = wat_ref[...]
    ba = ba_ref[...]                 # (1, H) f32
    vw = vw_ref[...]                 # (1, H) f32
    vb = vb_ref[0]                   # scalar

    def scores(x2d):
        # attn Linear on the MXU (f32 accumulate), tanh on the EUP, and the
        # v Linear (N=1) as a VPU multiply + lane reduce (no degenerate matmul).
        en = jnp.dot(x2d, wat, preferred_element_type=jnp.float32) + ba
        en = jnp.tanh(en)
        return jnp.sum(en * vw, axis=-1, keepdims=True)        # (rows, 1)

    # --- pass 1: e[b, t] -----------------------------------------------------
    # Only the small (TB, T) score tile survives this pass; the x block is
    # re-read from VMEM in pass 2, so no T x (TB, H) vreg live range / spills.
    if TB % 8 == 0:
        # Fused: one MXU matmul with M = T*TB.  The logical (T,TB,H)->(T*TB,H)
        # flatten is a sublane concatenation (layout-trivial for TB % 8 == 0).
        x2d = jnp.concatenate([x_ref[t] for t in range(T)], axis=0)
        s = scores(x2d)                                         # (T*TB, 1)
        e = jnp.concatenate([s[t * TB:(t + 1) * TB] for t in range(T)], axis=-1)
    else:
        # Tiny / unaligned batch tile: T small matmuls, lane-concatenated.
        e = jnp.concatenate([scores(x_ref[t]) for t in range(T)], axis=-1)
    e = e + vb                                                  # (TB, T)

    # --- softmax over the sequence axis (lanes) --------------------------------
    e = e - jnp.max(e, axis=-1, keepdims=True)
    w = jnp.exp(e)
    w = w / jnp.sum(w, axis=-1, keepdims=True)                  # (TB, T)

    # --- pass 2: attended context (VPU), re-reading x from VMEM ----------------
    acc = w[:, 0:1] * x_ref[0].astype(jnp.float32)
    for t in range(1, T):
        acc = acc + w[:, t:t + 1] * x_ref[t].astype(jnp.float32)
    # Note: for H < 128 these stores are lane-masked; output traffic is only
    # 1/T of the input traffic so the kernel stays input-DMA bound regardless.
    o_ref[...] = acc.astype(o_ref.dtype)


def self_attn_forward(encoder_outputs, wa, ba, vw, vb, *, batch_tile=None):
    """encoder_outputs: (T, B, H) as in the PyTorch module. Returns (B, H)."""
    T, B, H = encoder_outputs.shape
    dtype = encoder_outputs.dtype
    itemsize = jnp.dtype(dtype).itemsize

    TB = _choose_batch_tile(T, B, H, itemsize) if batch_tile is None else batch_tile
    TB = min(TB, B)
    if TB < B and TB % 8 != 0:
        TB = max(8, (TB // 8) * 8)          # sublane rule unless the block is full-dim
    grid = pl.cdiv(B, TB)                   # ragged edge handled by Pallas (no jnp.pad pass)

    wat = wa.T                              # one-time transpose outside the kernel
    ba2 = ba.reshape(1, H).astype(jnp.float32)
    vw2 = vw.reshape(1, H).astype(jnp.float32)
    vb1 = vb.reshape(1).astype(jnp.float32)

    return pl.pallas_call(
        self_attn_kernel,
        out_shape=jax.ShapeDtypeStruct((B, H), dtype),
        grid=(grid,),
        in_specs=[
            pl.BlockSpec((T, TB, H), lambda i: (0, i, 0)),        # batch-tile slab of (T,B,H)
            pl.BlockSpec((H, H), lambda i: (0, 0)),               # attn.weight^T (resident)
            pl.BlockSpec((1, H), lambda i: (0, 0)),               # attn.bias
            pl.BlockSpec((1, H), lambda i: (0, 0)),               # v.weight
            pl.BlockSpec(memory_space=pltpu.MemorySpace.SMEM),    # v.bias scalar
        ],
        out_specs=pl.BlockSpec((TB, H), lambda i: (i, 0)),        # dense 2D output block
        compiler_params=pltpu.CompilerParams(
            dimension_semantics=("parallel",),
            vmem_limit_bytes=_VMEM_LIMIT_BYTES,
        ),
    )(encoder_outputs, wat, ba2, vw2, vb1)


def self_attn_ref(encoder_outputs, wa, ba, vw, vb):
    """Pure-JAX reference mirroring the PyTorch forward pass."""
    x = jnp.transpose(encoder_outputs, (1, 0, 2))                  # (B, T, H)
    energy = jnp.tanh(jnp.einsum('bth,oh->bto', x, wa) + ba)       # (B, T, H)
    e = jnp.einsum('bth,oh->bto', energy, vw) + vb                 # (B, T, 1)
    attn = jax.nn.softmax(e[..., 0], axis=1)                       # (B, T)
    return jnp.einsum('bt,bth->bh', attn, x)                       # (B, H)


if __name__ == "__main__":
    T, B, H = 8, 2, 32  # seq, batch, hidden

    key = jax.random.PRNGKey(0)
    k_x, k_wa, k_ba, k_vw, k_vb = jax.random.split(key, 5)

    # PyTorch Linear-style uniform(-1/sqrt(in), 1/sqrt(in)) init.
    bound = 1.0 / (H ** 0.5)
    wa = jax.random.uniform(k_wa, (H, H), jnp.float32, -bound, bound)   # attn.weight
    ba = jax.random.uniform(k_ba, (H,), jnp.float32, -bound, bound)     # attn.bias
    vw = jax.random.uniform(k_vw, (1, H), jnp.float32, -bound, bound)   # v.weight
    vb = jax.random.uniform(k_vb, (1,), jnp.float32, -bound, bound)     # v.bias

    # Small shape from the spec (exercises the full-dim / per-t path).
    encoder_outputs = jax.random.normal(k_x, (T, B, H), jnp.float32)
    out = jax.block_until_ready(self_attn_forward(encoder_outputs, wa, ba, vw, vb))
    ref = self_attn_ref(encoder_outputs, wa, ba, vw, vb)
    assert out.shape == (B, H)
    assert jnp.allclose(out, ref, atol=1e-5, rtol=1e-5), "mismatch vs reference (small)"

    # Larger batch: exercises the fused single-matmul path (TB % 8 == 0) and a
    # multi-step, megacore-shardable grid.
    B2 = 48
    x2 = jax.random.normal(jax.random.PRNGKey(1), (T, B2, H), jnp.float32)
    out2 = jax.block_until_ready(self_attn_forward(x2, wa, ba, vw, vb))
    ref2 = self_attn_ref(x2, wa, ba, vw, vb)
    assert out2.shape == (B2, H)
    assert jnp.allclose(out2, ref2, atol=1e-5, rtol=1e-5), "mismatch vs reference (tiled)"

    print("KERNEL_OK")
</pallas_src>

<mosaic_0001>
module attributes {stable_mosaic.version = 11 : i64} {
  func.func @self_attn_kernel(%arg0: i32, %arg1: memref<8x2x32xf32, #tpu.memory_space<vmem>>, %arg2: memref<32x32xf32, #tpu.memory_space<vmem>>, %arg3: memref<1x32xf32, #tpu.memory_space<vmem>>, %arg4: memref<1x32xf32, #tpu.memory_space<vmem>>, %arg5: memref<1xf32, #tpu.memory_space<smem>>, %arg6: memref<2x32xf32, #tpu.memory_space<vmem>>) attributes {dimension_semantics = [#tpu.dimension_semantics<parallel>], iteration_bounds = array<i64: 1>, scalar_prefetch = 0 : i64, scratch_operands = 0 : i64, tpu.core_type = #tpu.core_type<tc>, window_params = [{transform_indices = @transform_0, window_bounds = array<i64: 8, 2, 32>}, {pipeline_mode = #tpu.pipeline_mode<synchronous>, transform_indices = @transform_1, window_bounds = array<i64: 32, 32>}, {pipeline_mode = #tpu.pipeline_mode<synchronous>, transform_indices = @transform_2, window_bounds = array<i64: 1, 32>}, {pipeline_mode = #tpu.pipeline_mode<synchronous>, transform_indices = @transform_3, window_bounds = array<i64: 1, 32>}, {transform_indices = @transform_4, window_bounds = array<i64: 1>}, {transform_indices = @transform_5, window_bounds = array<i64: 2, 32>}]} {
    %c0 = arith.constant 0 : index
    %c0_0 = arith.constant 0 : index
    %0 = vector.load %arg2[%c0, %c0_0] : memref<32x32xf32, #tpu.memory_space<vmem>>, vector<32x32xf32>
    %c0_1 = arith.constant 0 : index
    %c0_2 = arith.constant 0 : index
    %1 = vector.load %arg3[%c0_1, %c0_2] : memref<1x32xf32, #tpu.memory_space<vmem>>, vector<1x32xf32>
    %c0_3 = arith.constant 0 : index
    %c0_4 = arith.constant 0 : index
    %2 = vector.load %arg4[%c0_3, %c0_4] : memref<1x32xf32, #tpu.memory_space<vmem>>, vector<1x32xf32>
    %c0_5 = arith.constant 0 : index
    %3 = memref.load %arg5[%c0_5] : memref<1xf32, #tpu.memory_space<smem>>
    %c0_6 = arith.constant 0 : index
    %c0_7 = arith.constant 0 : index
    %c0_8 = arith.constant 0 : index
    %4 = vector.load %arg1[%c0_6, %c0_7, %c0_8] : memref<8x2x32xf32, #tpu.memory_space<vmem>>, vector<1x2x32xf32>
    %5 = vector.shape_cast %4 : vector<1x2x32xf32> to vector<2x32xf32>
    %cst = arith.constant dense<0.000000e+00> : vector<2x32xf32>
    %6 = tpu.matmul %5, %0, %cst {dimension_numbers = #tpu.dot_dimension_numbers<[1], [0], [0], [1], [0, 0, 1, 1], [], []>} : vector<2x32xf32>, vector<32x32xf32>, vector<2x32xf32> -> vector<2x32xf32>
    %7 = vector.broadcast %1 : vector<1x32xf32> to vector<2x32xf32>
    %8 = arith.addf %6, %7 : vector<2x32xf32>
    %9 = math.tanh %8 : vector<2x32xf32>
    %10 = vector.broadcast %2 : vector<1x32xf32> to vector<2x32xf32>
    %11 = arith.mulf %9, %10 : vector<2x32xf32>
    %cst_9 = arith.constant dense<0.000000e+00> : vector<2xf32>
    %12 = vector.multi_reduction <add>, %11, %cst_9 [1] : vector<2x32xf32> to vector<2xf32>
    %13 = vector.shape_cast %12 : vector<2xf32> to vector<2x1xf32>
    %c1 = arith.constant 1 : index
    %c0_10 = arith.constant 0 : index
    %c0_11 = arith.constant 0 : index
    %14 = vector.load %arg1[%c1, %c0_10, %c0_11] : memref<8x2x32xf32, #tpu.memory_space<vmem>>, vector<1x2x32xf32>
    %15 = vector.shape_cast %14 : vector<1x2x32xf32> to vector<2x32xf32>
    %cst_12 = arith.constant dense<0.000000e+00> : vector<2x32xf32>
    %16 = tpu.matmul %15, %0, %cst_12 {dimension_numbers = #tpu.dot_dimension_numbers<[1], [0], [0], [1], [0, 0, 1, 1], [], []>} : vector<2x32xf32>, vector<32x32xf32>, vector<2x32xf32> -> vector<2x32xf32>
    %17 = vector.broadcast %1 : vector<1x32xf32> to vector<2x32xf32>
    %18 = arith.addf %16, %17 : vector<2x32xf32>
    %19 = math.tanh %18 : vector<2x32xf32>
    %20 = vector.broadcast %2 : vector<1x32xf32> to vector<2x32xf32>
    %21 = arith.mulf %19, %20 : vector<2x32xf32>
    %cst_13 = arith.constant dense<0.000000e+00> : vector<2xf32>
    %22 = vector.multi_reduction <add>, %21, %cst_13 [1] : vector<2x32xf32> to vector<2xf32>
    %23 = vector.shape_cast %22 : vector<2xf32> to vector<2x1xf32>
    %c2 = arith.constant 2 : index
    %c0_14 = arith.constant 0 : index
    %c0_15 = arith.constant 0 : index
    %24 = vector.load %arg1[%c2, %c0_14, %c0_15] : memref<8x2x32xf32, #tpu.memory_space<vmem>>, vector<1x2x32xf32>
    %25 = vector.shape_cast %24 : vector<1x2x32xf32> to vector<2x32xf32>
    %cst_16 = arith.constant dense<0.000000e+00> : vector<2x32xf32>
    %26 = tpu.matmul %25, %0, %cst_16 {dimension_numbers = #tpu.dot_dimension_numbers<[1], [0], [0], [1], [0, 0, 1, 1], [], []>} : vector<2x32xf32>, vector<32x32xf32>, vector<2x32xf32> -> vector<2x32xf32>
    %27 = vector.broadcast %1 : vector<1x32xf32> to vector<2x32xf32>
    %28 = arith.addf %26, %27 : vector<2x32xf32>
    %29 = math.tanh %28 : vector<2x32xf32>
    %30 = vector.broadcast %2 : vector<1x32xf32> to vector<2x32xf32>
    %31 = arith.mulf %29, %30 : vector<2x32xf32>
    %cst_17 = arith.constant dense<0.000000e+00> : vector<2xf32>
    %32 = vector.multi_reduction <add>, %31, %cst_17 [1] : vector<2x32xf32> to vector<2xf32>
    %33 = vector.shape_cast %32 : vector<2xf32> to vector<2x1xf32>
    %c3 = arith.constant 3 : index
    %c0_18 = arith.constant 0 : index
    %c0_19 = arith.constant 0 : index
    %34 = vector.load %arg1[%c3, %c0_18, %c0_19] : memref<8x2x32xf32, #tpu.memory_space<vmem>>, vector<1x2x32xf32>
    %35 = vector.shape_cast %34 : vector<1x2x32xf32> to vector<2x32xf32>
    %cst_20 = arith.constant dense<0.000000e+00> : vector<2x32xf32>
    %36 = tpu.matmul %35, %0, %cst_20 {dimension_numbers = #tpu.dot_dimension_numbers<[1], [0], [0], [1], [0, 0, 1, 1], [], []>} : vector<2x32xf32>, vector<32x32xf32>, vector<2x32xf32> -> vector<2x32xf32>
    %37 = vector.broadcast %1 : vector<1x32xf32> to vector<2x32xf32>
    %38 = arith.addf %36, %37 : vector<2x32xf32>
    %39 = math.tanh %38 : vector<2x32xf32>
    %40 = vector.broadcast %2 : vector<1x32xf32> to vector<2x32xf32>
    %41 = arith.mulf %39, %40 : vector<2x32xf32>
    %cst_21 = arith.constant dense<0.000000e+00> : vector<2xf32>
    %42 = vector.multi_reduction <add>, %41, %cst_21 [1] : vector<2x32xf32> to vector<2xf32>
    %43 = vector.shape_cast %42 : vector<2xf32> to vector<2x1xf32>
    %c4 = arith.constant 4 : index
    %c0_22 = arith.constant 0 : index
    %c0_23 = arith.constant 0 : index
    %44 = vector.load %arg1[%c4, %c0_22, %c0_23] : memref<8x2x32xf32, #tpu.memory_space<vmem>>, vector<1x2x32xf32>
    %45 = vector.shape_cast %44 : vector<1x2x32xf32> to vector<2x32xf32>
    %cst_24 = arith.constant dense<0.000000e+00> : vector<2x32xf32>
    %46 = tpu.matmul %45, %0, %cst_24 {dimension_numbers = #tpu.dot_dimension_numbers<[1], [0], [0], [1], [0, 0, 1, 1], [], []>} : vector<2x32xf32>, vector<32x32xf32>, vector<2x32xf32> -> vector<2x32xf32>
    %47 = vector.broadcast %1 : vector<1x32xf32> to vector<2x32xf32>
    %48 = arith.addf %46, %47 : vector<2x32xf32>
    %49 = math.tanh %48 : vector<2x32xf32>
    %50 = vector.broadcast %2 : vector<1x32xf32> to vector<2x32xf32>
    %51 = arith.mulf %49, %50 : vector<2x32xf32>
    %cst_25 = arith.constant dense<0.000000e+00> : vector<2xf32>
    %52 = vector.multi_reduction <add>, %51, %cst_25 [1] : vector<2x32xf32> to vector<2xf32>
    %53 = vector.shape_cast %52 : vector<2xf32> to vector<2x1xf32>
    %c5 = arith.constant 5 : index
    %c0_26 = arith.constant 0 : index
    %c0_27 = arith.constant 0 : index
    %54 = vector.load %arg1[%c5, %c0_26, %c0_27] : memref<8x2x32xf32, #tpu.memory_space<vmem>>, vector<1x2x32xf32>
    %55 = vector.shape_cast %54 : vector<1x2x32xf32> to vector<2x32xf32>
    %cst_28 = arith.constant dense<0.000000e+00> : vector<2x32xf32>
    %56 = tpu.matmul %55, %0, %cst_28 {dimension_numbers = #tpu.dot_dimension_numbers<[1], [0], [0], [1], [0, 0, 1, 1], [], []>} : vector<2x32xf32>, vector<32x32xf32>, vector<2x32xf32> -> vector<2x32xf32>
    %57 = vector.broadcast %1 : vector<1x32xf32> to vector<2x32xf32>
    %58 = arith.addf %56, %57 : vector<2x32xf32>
    %59 = math.tanh %58 : vector<2x32xf32>
    %60 = vector.broadcast %2 : vector<1x32xf32> to vector<2x32xf32>
    %61 = arith.mulf %59, %60 : vector<2x32xf32>
    %cst_29 = arith.constant dense<0.000000e+00> : vector<2xf32>
    %62 = vector.multi_reduction <add>, %61, %cst_29 [1] : vector<2x32xf32> to vector<2xf32>
    %63 = vector.shape_cast %62 : vector<2xf32> to vector<2x1xf32>
    %c6 = arith.constant 6 : index
    %c0_30 = arith.constant 0 : index
    %c0_31 = arith.constant 0 : index
    %64 = vector.load %arg1[%c6, %c0_30, %c0_31] : memref<8x2x32xf32, #tpu.memory_space<vmem>>, vector<1x2x32xf32>
    %65 = vector.shape_cast %64 : vector<1x2x32xf32> to vector<2x32xf32>
    %cst_32 = arith.constant dense<0.000000e+00> : vector<2x32xf32>
    %66 = tpu.matmul %65, %0, %cst_32 {dimension_numbers = #tpu.dot_dimension_numbers<[1], [0], [0], [1], [0, 0, 1, 1], [], []>} : vector<2x32xf32>, vector<32x32xf32>, vector<2x32xf32> -> vector<2x32xf32>
    %67 = vector.broadcast %1 : vector<1x32xf32> to vector<2x32xf32>
    %68 = arith.addf %66, %67 : vector<2x32xf32>
    %69 = math.tanh %68 : vector<2x32xf32>
    %70 = vector.broadcast %2 : vector<1x32xf32> to vector<2x32xf32>
    %71 = arith.mulf %69, %70 : vector<2x32xf32>
    %cst_33 = arith.constant dense<0.000000e+00> : vector<2xf32>
    %72 = vector.multi_reduction <add>, %71, %cst_33 [1] : vector<2x32xf32> to vector<2xf32>
    %73 = vector.shape_cast %72 : vector<2xf32> to vector<2x1xf32>
    %c7 = arith.constant 7 : index
    %c0_34 = arith.constant 0 : index
    %c0_35 = arith.constant 0 : index
    %74 = vector.load %arg1[%c7, %c0_34, %c0_35] : memref<8x2x32xf32, #tpu.memory_space<vmem>>, vector<1x2x32xf32>
    %75 = vector.shape_cast %74 : vector<1x2x32xf32> to vector<2x32xf32>
    %cst_36 = arith.constant dense<0.000000e+00> : vector<2x32xf32>
    %76 = tpu.matmul %75, %0, %cst_36 {dimension_numbers = #tpu.dot_dimension_numbers<[1], [0], [0], [1], [0, 0, 1, 1], [], []>} : vector<2x32xf32>, vector<32x32xf32>, vector<2x32xf32> -> vector<2x32xf32>
    %77 = vector.broadcast %1 : vector<1x32xf32> to vector<2x32xf32>
    %78 = arith.addf %76, %77 : vector<2x32xf32>
    %79 = math.tanh %78 : vector<2x32xf32>
    %80 = vector.broadcast %2 : vector<1x32xf32> to vector<2x32xf32>
    %81 = arith.mulf %79, %80 : vector<2x32xf32>
    %cst_37 = arith.constant dense<0.000000e+00> : vector<2xf32>
    %82 = vector.multi_reduction <add>, %81, %cst_37 [1] : vector<2x32xf32> to vector<2xf32>
    %83 = vector.shape_cast %82 : vector<2xf32> to vector<2x1xf32>
    %84 = tpu.concatenate %13, %23, %33, %43, %53, %63, %73, %83 in 1 : vector<2x1xf32>, vector<2x1xf32>, vector<2x1xf32>, vector<2x1xf32>, vector<2x1xf32>, vector<2x1xf32>, vector<2x1xf32>, vector<2x1xf32> -> vector<2x8xf32>
    %85 = vector.broadcast %3 : f32 to vector<2x8xf32>
    %86 = arith.addf %84, %85 : vector<2x8xf32>
    %cst_38 = arith.constant dense<0xFF800000> : vector<2xf32>
    %87 = vector.multi_reduction <maximumf>, %86, %cst_38 [1] : vector<2x8xf32> to vector<2xf32>
    %88 = vector.shape_cast %87 : vector<2xf32> to vector<2x1xf32>
    %89 = vector.broadcast %88 : vector<2x1xf32> to vector<2x8xf32>
    %90 = arith.subf %86, %89 : vector<2x8xf32>
    %91 = math.exp %90 : vector<2x8xf32>
    %cst_39 = arith.constant dense<0.000000e+00> : vector<2xf32>
    %92 = vector.multi_reduction <add>, %91, %cst_39 [1] : vector<2x8xf32> to vector<2xf32>
    %93 = vector.shape_cast %92 : vector<2xf32> to vector<2x1xf32>
    %94 = vector.broadcast %93 : vector<2x1xf32> to vector<2x8xf32>
    %95 = arith.divf %91, %94 : vector<2x8xf32>
    %96 = vector.extract_strided_slice %95 {offsets = [0, 0], sizes = [2, 1], strides = [1, 1]} : vector<2x8xf32> to vector<2x1xf32>
    %c0_40 = arith.constant 0 : index
    %c0_41 = arith.constant 0 : index
    %c0_42 = arith.constant 0 : index
    %97 = vector.load %arg1[%c0_40, %c0_41, %c0_42] : memref<8x2x32xf32, #tpu.memory_space<vmem>>, vector<1x2x32xf32>
    %98 = vector.shape_cast %97 : vector<1x2x32xf32> to vector<2x32xf32>
    %99 = vector.broadcast %96 : vector<2x1xf32> to vector<2x32xf32>
    %100 = arith.mulf %99, %98 : vector<2x32xf32>
    %101 = vector.extract_strided_slice %95 {offsets = [0, 1], sizes = [2, 1], strides = [1, 1]} : vector<2x8xf32> to vector<2x1xf32>
    %c1_43 = arith.constant 1 : index
    %c0_44 = arith.constant 0 : index
    %c0_45 = arith.constant 0 : index
    %102 = vector.load %arg1[%c1_43, %c0_44, %c0_45] : memref<8x2x32xf32, #tpu.memory_space<vmem>>, vector<1x2x32xf32>
    %103 = vector.shape_cast %102 : vector<1x2x32xf32> to vector<2x32xf32>
    %104 = vector.broadcast %101 : vector<2x1xf32> to vector<2x32xf32>
    %105 = arith.mulf %104, %103 : vector<2x32xf32>
    %106 = arith.addf %100, %105 : vector<2x32xf32>
    %107 = vector.extract_strided_slice %95 {offsets = [0, 2], sizes = [2, 1], strides = [1, 1]} : vector<2x8xf32> to vector<2x1xf32>
    %c2_46 = arith.constant 2 : index
    %c0_47 = arith.constant 0 : index
    %c0_48 = arith.constant 0 : index
    %108 = vector.load %arg1[%c2_46, %c0_47, %c0_48] : memref<8x2x32xf32, #tpu.memory_space<vmem>>, vector<1x2x32xf32>
    %109 = vector.shape_cast %108 : vector<1x2x32xf32> to vector<2x32xf32>
    %110 = vector.broadcast %107 : vector<2x1xf32> to vector<2x32xf32>
    %111 = arith.mulf %110, %109 : vector<2x32xf32>
    %112 = arith.addf %106, %111 : vector<2x32xf32>
    %113 = vector.extract_strided_slice %95 {offsets = [0, 3], sizes = [2, 1], strides = [1, 1]} : vector<2x8xf32> to vector<2x1xf32>
    %c3_49 = arith.constant 3 : index
    %c0_50 = arith.constant 0 : index
    %c0_51 = arith.constant 0 : index
    %114 = vector.load %arg1[%c3_49, %c0_50, %c0_51] : memref<8x2x32xf32, #tpu.memory_space<vmem>>, vector<1x2x32xf32>
    %115 = vector.shape_cast %114 : vector<1x2x32xf32> to vector<2x32xf32>
    %116 = vector.broadcast %113 : vector<2x1xf32> to vector<2x32xf32>
    %117 = arith.mulf %116, %115 : vector<2x32xf32>
    %118 = arith.addf %112, %117 : vector<2x32xf32>
    %119 = vector.extract_strided_slice %95 {offsets = [0, 4], sizes = [2, 1], strides = [1, 1]} : vector<2x8xf32> to vector<2x1xf32>
    %c4_52 = arith.constant 4 : index
    %c0_53 = arith.constant 0 : index
    %c0_54 = arith.constant 0 : index
    %120 = vector.load %arg1[%c4_52, %c0_53, %c0_54] : memref<8x2x32xf32, #tpu.memory_space<vmem>>, vector<1x2x32xf32>
    %121 = vector.shape_cast %120 : vector<1x2x32xf32> to vector<2x32xf32>
    %122 = vector.broadcast %119 : vector<2x1xf32> to vector<2x32xf32>
    %123 = arith.mulf %122, %121 : vector<2x32xf32>
    %124 = arith.addf %118, %123 : vector<2x32xf32>
    %125 = vector.extract_strided_slice %95 {offsets = [0, 5], sizes = [2, 1], strides = [1, 1]} : vector<2x8xf32> to vector<2x1xf32>
    %c5_55 = arith.constant 5 : index
    %c0_56 = arith.constant 0 : index
    %c0_57 = arith.constant 0 : index
    %126 = vector.load %arg1[%c5_55, %c0_56, %c0_57] : memref<8x2x32xf32, #tpu.memory_space<vmem>>, vector<1x2x32xf32>
    %127 = vector.shape_cast %126 : vector<1x2x32xf32> to vector<2x32xf32>
    %128 = vector.broadcast %125 : vector<2x1xf32> to vector<2x32xf32>
    %129 = arith.mulf %128, %127 : vector<2x32xf32>
    %130 = arith.addf %124, %129 : vector<2x32xf32>
    %131 = vector.extract_strided_slice %95 {offsets = [0, 6], sizes = [2, 1], strides = [1, 1]} : vector<2x8xf32> to vector<2x1xf32>
    %c6_58 = arith.constant 6 : index
    %c0_59 = arith.constant 0 : index
    %c0_60 = arith.constant 0 : index
    %132 = vector.load %arg1[%c6_58, %c0_59, %c0_60] : memref<8x2x32xf32, #tpu.memory_space<vmem>>, vector<1x2x32xf32>
    %133 = vector.shape_cast %132 : vector<1x2x32xf32> to vector<2x32xf32>
    %134 = vector.broadcast %131 : vector<2x1xf32> to vector<2x32xf32>
    %135 = arith.mulf %134, %133 : vector<2x32xf32>
    %136 = arith.addf %130, %135 : vector<2x32xf32>
    %137 = vector.extract_strided_slice %95 {offsets = [0, 7], sizes = [2, 1], strides = [1, 1]} : vector<2x8xf32> to vector<2x1xf32>
    %c7_61 = arith.constant 7 : index
    %c0_62 = arith.constant 0 : index
    %c0_63 = arith.constant 0 : index
    %138 = vector.load %arg1[%c7_61, %c0_62, %c0_63] : memref<8x2x32xf32, #tpu.memory_space<vmem>>, vector<1x2x32xf32>
    %139 = vector.shape_cast %138 : vector<1x2x32xf32> to vector<2x32xf32>
    %140 = vector.broadcast %137 : vector<2x1xf32> to vector<2x32xf32>
    %141 = arith.mulf %140, %139 : vector<2x32xf32>
    %142 = arith.addf %136, %141 : vector<2x32xf32>
    %c0_64 = arith.constant 0 : index
    %c0_65 = arith.constant 0 : index
    %143 = vector.load %arg6[%c0_64, %c0_65] : memref<2x32xf32, #tpu.memory_space<vmem>>, vector<2x32xf32>
    tpu.vector_store %arg6[%c0_64, %c0_65], %142 {strides = array<i32>} : memref<2x32xf32, #tpu.memory_space<vmem>>, vector<2x32xf32>,
    return
  }
  func.func @transform_0(%arg0: i32) -> (i32, i32, i32) {
    %c0_i32 = arith.constant 0 : i32
    %c0_i32_0 = arith.constant 0 : i32
    %c0_i32_1 = arith.constant 0 : i32
    return %c0_i32, %arg0, %c0_i32_0 : i32, i32, i32
  }
  func.func @transform_1(%arg0: i32) -> (i32, i32) {
    %c0_i32 = arith.constant 0 : i32
    %c0_i32_0 = arith.constant 0 : i32
    %c0_i32_1 = arith.constant 0 : i32
    return %c0_i32, %c0_i32_0 : i32, i32
  }
  func.func @transform_2(%arg0: i32) -> (i32, i32) {
    %c0_i32 = arith.constant 0 : i32
    %c0_i32_0 = arith.constant 0 : i32
    %c0_i32_1 = arith.constant 0 : i32
    return %c0_i32, %c0_i32_0 : i32, i32
  }
  func.func @transform_3(%arg0: i32) -> (i32, i32) {
    %c0_i32 = arith.constant 0 : i32
    %c0_i32_0 = arith.constant 0 : i32
    %c0_i32_1 = arith.constant 0 : i32
    return %c0_i32, %c0_i32_0 : i32, i32
  }
  func.func @transform_4(%arg0: i32) -> i32 {
    %c0_i32 = arith.constant 0 : i32
    %c0_i32_0 = arith.constant 0 : i32
    return %c0_i32 : i32
  }
  func.func @transform_5(%arg0: i32) -> (i32, i32) {
    %c0_i32 = arith.constant 0 : i32
    %c0_i32_0 = arith.constant 0 : i32
    return %arg0, %c0_i32 : i32, i32
  }
}

</mosaic_0001>

<llo_original>
// kernel: tpu_custom_call.1
$region0: #{tpu_custom_call.1}
  #allocation0 [shape = 'u32[]', space=smem, size = 0x4, offset = 0x4, fixed_abs, tag = 'smem constant byte address 0x4 - core index']
  #allocation1 [shape = 'u32[72,128]{1,0:T(1,128)}', space=vmem, size = 0x9000, scoped, tag = 'internal scratch']
  #allocation2 [shape = 'f32[1]{0:T(128)S(6)}', space=smem, size = 0x200, scoped, tag = 'scoped memory for tpu_custom_call.1']
  %s0 = inlined_call_operand.hbm [shape: f32[8,2,32], index: 0, kind: input, shape index: {}]
  %s1 = inlined_call_operand.hbm [shape: f32[32,32], index: 1, kind: input, shape index: {}]
  %s2 = inlined_call_operand.vmem [shape: f32[1,32], index: 2, kind: input, shape index: {}]
  %s3 = inlined_call_operand.vmem [shape: f32[1,32], index: 3, kind: input, shape index: {}]
  %s4 = inlined_call_operand.<no memory space> [shape: f32[1], index: 4, kind: input, shape index: {}]
  %s5 = inlined_call_operand.hbm [shape: f32[2,32], index: 5, kind: output, shape index: {}]
  %s6 = sld [smem:[#allocation0]]
  $region38: #{tpu_custom_call.1} parent=0
    _
  %s8 = ssub.s32 1, %s6
  %s9 = scalar_select 0, %s8, %s6
  %10 = sst [smem:[#allocation2]] %s4
  $region1: #{tpu_custom_call.1} parent=0
    #allocation3 [shape = 'u8[8192]{0}', space=vmem, size = 0x2000, scoped, tag = 'input window, operand 0, single buffered']
    #allocation4 [shape = 's32[1]{0}', space=sflag, size = 0x4, scoped, tag = 'scoped memory for tpu_custom_call.1']
    #allocation5 [shape = 's32[1]{0}', space=sflag, size = 0x4, scoped, tag = 'scoped memory for tpu_custom_call.1']
    #allocation6 [shape = 'u8[16384]{0}', space=vmem, size = 0x4000, scoped, tag = 'input window, operand 1, single buffered']
    #allocation7 [shape = 's32[1]{0}', space=sflag, size = 0x4, scoped, tag = 'scoped memory for tpu_custom_call.1']
    #allocation8 [shape = 'u8[1024]{0}', space=vmem, size = 0x400, scoped, tag = 'output window, operand 0, single buffered']
    %11 = vsyncpa [#allocation4], 0
    %12 = vsyncpa [#allocation7], 0
    %13 = vsyncpa [#allocation5], 0
    // Predicated region
    $region2: #{tpu_custom_call.1} parent=1 // pred_check
      _
    $region3: #{tpu_custom_call.1} parent=1 // pred_check_branch
      %15 = sbr.rel (0) target = $region5
    $region4: #{tpu_custom_call.1} parent=1 // pred_region
      %17 = vsyncadd [#allocation4], 0
      %s18 = sshll.u32 %s0, 4
      %s19 = int_to_ptr.hbm [resolvable:$true] %s18
      %s20 = sshll.u32 [#allocation3], 4
      %s21 = int_to_ptr.vmem [resolvable:$true] %s20
      %26 = dma.hbm_to_vmem [thread:$0]  %s19, 256, %s21, [#allocation4], 32, 32, 2
    $region5: #{tpu_custom_call.1} parent=1 // pred_fallthru
      _
    // Predicated region
    $region6: #{tpu_custom_call.1} parent=1 // pred_check
      _
    $region7: #{tpu_custom_call.1} parent=1 // pred_check_branch
      %28 = sbr.rel (0) target = $region9
    $region8: #{tpu_custom_call.1} parent=1 // pred_region
      %30 = vsyncadd [#allocation7], 0
      %s31 = sshll.u32 %s1, 4
      %s32 = int_to_ptr.hbm [resolvable:$true] %s31
      %s33 = sshll.u32 [#allocation6], 4
      %s34 = int_to_ptr.vmem [resolvable:$true] %s33
      %39 = dma.hbm_to_vmem [thread:$0]  %s32, 512, %s34, [#allocation7], 128, 128, 8
    $region9: #{tpu_custom_call.1} parent=1 // pred_fallthru
      _
    // Predicated region
    $region10: #{tpu_custom_call.1} parent=1 // pred_check
      _
    $region11: #{tpu_custom_call.1} parent=1 // pred_check_branch
      %41 = sbr.rel (0) target = $region13
    $region12: #{tpu_custom_call.1} parent=1 // pred_region
      _
    $region13: #{tpu_custom_call.1} parent=1 // pred_fallthru
      _
    // Predicated region
    $region14: #{tpu_custom_call.1} parent=1 // pred_check
      _
    $region15: #{tpu_custom_call.1} parent=1 // pred_check_branch
      %43 = sbr.rel (0) target = $region17
    $region16: #{tpu_custom_call.1} parent=1 // pred_region
      _
    $region17: #{tpu_custom_call.1} parent=1 // pred_fallthru
      _
    // Predicated region
    $region18: #{tpu_custom_call.1} parent=1 // pred_check
      _
    $region19: #{tpu_custom_call.1} parent=1 // pred_check_branch
      %45 = sbr.rel (0) target = $region21
    $region20: #{tpu_custom_call.1} parent=1 // pred_region
      _
    $region21: #{tpu_custom_call.1} parent=1 // pred_fallthru
      _
    // Predicated region
    $region22: #{tpu_custom_call.1} parent=1 // pred_check
      _
    $region23: #{tpu_custom_call.1} parent=1 // pred_check_branch
      %47 = sbr.rel (0) target = $region25
    $region24: #{tpu_custom_call.1} parent=1 // pred_region
      %49 = dma.done [#allocation4], 256
    $region25: #{tpu_custom_call.1} parent=1 // pred_fallthru
      _
    // Predicated region
    $region26: #{tpu_custom_call.1} parent=1 // pred_check
      _
    $region27: #{tpu_custom_call.1} parent=1 // pred_check_branch
      %51 = sbr.rel (0) target = $region29
    $region28: #{tpu_custom_call.1} parent=1 // pred_region
      %53 = dma.done [#allocation7], 512
    $region29: #{tpu_custom_call.1} parent=1 // pred_fallthru
      _
    %v54 = vld [vmem:[#allocation6] sm:$0xff]
    %v55 = vld [vmem:[#allocation6 + $0x8] sm:$0xff]
    %v56 = vld [vmem:[#allocation6 + $0x10] sm:$0xff]
    %v57 = vld [vmem:[#allocation6 + $0x18] sm:$0xff]
    %v58 = vld [vmem:[%s2] sm:$0x1]
    %v59 = vld [vmem:[%s3] sm:$0x1]
    %s60 = sld [smem:[#allocation2]]
    %v61 = vld [vmem:[#allocation3] sm:$0x3]
    %v63 = vperm.slane %v58, 0
    %vm65 = vcmask 261120
    %v67 = vsel %vm65, %v61, 0
    %69 = vmatpush.msra.mxu0 0.0
    %70 = vmatpush.msra.mxu0 0.0
    %71 = vmatpush.msra.mxu0 0.0
    %72 = vmatpush.msra.mxu0 0.0
    %73 = vmatpush.msra.mxu0 0.0
    %74 = vmatpush.msra.mxu0 0.0
    %75 = vmatpush.msra.mxu0 0.0
    %76 = vmatpush.msra.mxu0 0.0
    %77 = vmatpush.msra.mxu0 0.0
    %78 = vmatpush.msra.mxu0 0.0
    %79 = vmatpush.msra.mxu0 0.0
    %80 = vmatpush.msra.mxu0 0.0
    %81 = vmatpush.msra.mxu0 %v57
    %82 = vmatpush.msra.mxu0 %v56
    %83 = vmatpush.msra.mxu0 %v55
    %84 = vmatpush.msra.mxu0 %v54
    %85 = vmatmul.f32.gmra.mxu0 %v67
    %v86 = vpop.f32.mrf.mxu0
    %v87 = vadd.f32 %v63, %v86
    %88 = vdwg.mxu0
    %v89 = vtanh.pop %v87
    %v91 = vperm.slane %v59, 0
    %v93 = vmul.f32 %v89, %v91
    %vm94 = vcmask 254976
    %v95 = vsel %vm94, %v93, 0.0
    %96 = vadd.xlane.f32.xlu0 %v95
    %v97 = vpop.xlane.xlu0 %96
    %s98 = scalar_lea.vmem [#allocation3], 2
    %v99 = vld [vmem:[%s98] sm:$0x3]
    %v101 = vsel %vm65, %v99, 0
    %103 = vmatpush.msra.mxu0 0.0
    %104 = vmatpush.msra.mxu0 0.0
    %105 = vmatpush.msra.mxu0 0.0
    %106 = vmatpush.msra.mxu0 0.0
    %107 = vmatpush.msra.mxu0 0.0
    %108 = vmatpush.msra.mxu0 0.0
    %109 = vmatpush.msra.mxu0 0.0
    %110 = vmatpush.msra.mxu0 0.0
    %111 = vmatpush.msra.mxu0 0.0
    %112 = vmatpush.msra.mxu0 0.0
    %113 = vmatpush.msra.mxu0 0.0
    %114 = vmatpush.msra.mxu0 0.0
    %115 = vmatpush.msra.mxu0 %v57
    %116 = vmatpush.msra.mxu0 %v56
    %117 = vmatpush.msra.mxu0 %v55
    %118 = vmatpush.msra.mxu0 %v54
    %119 = vmatmul.f32.gmra.mxu0 %v101
    %v120 = vpop.f32.mrf.mxu0
    %v121 = vadd.f32 %v63, %v120
    %122 = vdwg.mxu0
    %v123 = vtanh.pop %v121
    %v124 = vmul.f32 %v123, %v91
    %v125 = vsel %vm94, %v124, 0.0
    %126 = vadd.xlane.f32.xlu0 %v125
    %v127 = vpop.xlane.xlu0 %126
    %s128 = scalar_lea.vmem [#allocation3], 4
    %v129 = vld [vmem:[%s128] sm:$0x3]
    %v131 = vsel %vm65, %v129, 0
    %133 = vmatpush.msra.mxu0 0.0
    %134 = vmatpush.msra.mxu0 0.0
    %135 = vmatpush.msra.mxu0 0.0
    %136 = vmatpush.msra.mxu0 0.0
    %137 = vmatpush.msra.mxu0 0.0
    %138 = vmatpush.msra.mxu0 0.0
    %139 = vmatpush.msra.mxu0 0.0
    %140 = vmatpush.msra.mxu0 0.0
    %141 = vmatpush.msra.mxu0 0.0
    %142 = vmatpush.msra.mxu0 0.0
    %143 = vmatpush.msra.mxu0 0.0
    %144 = vmatpush.msra.mxu0 0.0
    %145 = vmatpush.msra.mxu0 %v57
    %146 = vmatpush.msra.mxu0 %v56
    %147 = vmatpush.msra.mxu0 %v55
    %148 = vmatpush.msra.mxu0 %v54
    %149 = vmatmul.f32.gmra.mxu0 %v131
    %v150 = vpop.f32.mrf.mxu0
    %v151 = vadd.f32 %v63, %v150
    %152 = vdwg.mxu0
    %v153 = vtanh.pop %v151
    %v154 = vmul.f32 %v153, %v91
    %v155 = vsel %vm94, %v154, 0.0
    %156 = vadd.xlane.f32.xlu0 %v155
    %v157 = vpop.xlane.xlu0 %156
    %s158 = scalar_lea.vmem [#allocation3], 6
    %v159 = vld [vmem:[%s158] sm:$0x3]
    %v161 = vsel %vm65, %v159, 0
    %163 = vmatpush.msra.mxu0 0.0
    %164 = vmatpush.msra.mxu0 0.0
    %165 = vmatpush.msra.mxu0 0.0
    %166 = vmatpush.msra.mxu0 0.0
    %167 = vmatpush.msra.mxu0 0.0
    %168 = vmatpush.msra.mxu0 0.0
    %169 = vmatpush.msra.mxu0 0.0
    %170 = vmatpush.msra.mxu0 0.0
    %171 = vmatpush.msra.mxu0 0.0
    %172 = vmatpush.msra.mxu0 0.0
    %173 = vmatpush.msra.mxu0 0.0
    %174 = vmatpush.msra.mxu0 0.0
    %175 = vmatpush.msra.mxu0 %v57
    %176 = vmatpush.msra.mxu0 %v56
    %177 = vmatpush.msra.mxu0 %v55
    %178 = vmatpush.msra.mxu0 %v54
    %179 = vmatmul.f32.gmra.mxu0 %v161
    %v180 = vpop.f32.mrf.mxu0
    %v181 = vadd.f32 %v63, %v180
    %182 = vdwg.mxu0
    %v183 = vtanh.pop %v181
    %v184 = vmul.f32 %v183, %v91
    %v185 = vsel %vm94, %v184, 0.0
    %186 = vadd.xlane.f32.xlu0 %v185
    %v187 = vpop.xlane.xlu0 %186
    %s188 = scalar_lea.vmem [#allocation3], 8
    %v189 = vld [vmem:[%s188] sm:$0x3]
    %v191 = vsel %vm65, %v189, 0
    %193 = vmatpush.msra.mxu0 0.0
    %194 = vmatpush.msra.mxu0 0.0
    %195 = vmatpush.msra.mxu0 0.0
    %196 = vmatpush.msra.mxu0 0.0
    %197 = vmatpush.msra.mxu0 0.0
    %198 = vmatpush.msra.mxu0 0.0
    %199 = vmatpush.msra.mxu0 0.0
    %200 = vmatpush.msra.mxu0 0.0
    %201 = vmatpush.msra.mxu0 0.0
    %202 = vmatpush.msra.mxu0 0.0
    %203 = vmatpush.msra.mxu0 0.0
    %204 = vmatpush.msra.mxu0 0.0
    %205 = vmatpush.msra.mxu0 %v57
    %206 = vmatpush.msra.mxu0 %v56
    %207 = vmatpush.msra.mxu0 %v55
    %208 = vmatpush.msra.mxu0 %v54
    %209 = vmatmul.f32.gmra.mxu0 %v191
    %v210 = vpop.f32.mrf.mxu0
    %v211 = vadd.f32 %v63, %v210
    %212 = vdwg.mxu0
    %v213 = vtanh.pop %v211
    %v214 = vmul.f32 %v213, %v91
    %v215 = vsel %vm94, %v214, 0.0
    %216 = vadd.xlane.f32.xlu0 %v215
    %v217 = vpop.xlane.xlu0 %216
    %s218 = scalar_lea.vmem [#allocation3], 10
    %v219 = vld [vmem:[%s218] sm:$0x3]
    %v221 = vsel %vm65, %v219, 0
    %223 = vmatpush.msra.mxu0 0.0
    %224 = vmatpush.msra.mxu0 0.0
    %225 = vmatpush.msra.mxu0 0.0
    %226 = vmatpush.msra.mxu0 0.0
    %227 = vmatpush.msra.mxu0 0.0
    %228 = vmatpush.msra.mxu0 0.0
    %229 = vmatpush.msra.mxu0 0.0
    %230 = vmatpush.msra.mxu0 0.0
    %231 = vmatpush.msra.mxu0 0.0
    %232 = vmatpush.msra.mxu0 0.0
    %233 = vmatpush.msra.mxu0 0.0
    %234 = vmatpush.msra.mxu0 0.0
    %235 = vmatpush.msra.mxu0 %v57
    %236 = vmatpush.msra.mxu0 %v56
    %237 = vmatpush.msra.mxu0 %v55
    %238 = vmatpush.msra.mxu0 %v54
    %239 = vmatmul.f32.gmra.mxu0 %v221
    %v240 = vpop.f32.mrf.mxu0
    %v241 = vadd.f32 %v63, %v240
    %242 = vdwg.mxu0
    %v243 = vtanh.pop %v241
    %v244 = vmul.f32 %v243, %v91
    %v245 = vsel %vm94, %v244, 0.0
    %246 = vadd.xlane.f32.xlu0 %v245
    %v247 = vpop.xlane.xlu0 %246
    %s248 = scalar_lea.vmem [#allocation3], 12
    %v249 = vld [vmem:[%s248] sm:$0x3]
    %v251 = vsel %vm65, %v249, 0
    %253 = vmatpush.msra.mxu0 0.0
    %254 = vmatpush.msra.mxu0 0.0
    %255 = vmatpush.msra.mxu0 0.0
    %256 = vmatpush.msra.mxu0 0.0
    %257 = vmatpush.msra.mxu0 0.0
    %258 = vmatpush.msra.mxu0 0.0
    %259 = vmatpush.msra.mxu0 0.0
    %260 = vmatpush.msra.mxu0 0.0
    %261 = vmatpush.msra.mxu0 0.0
    %262 = vmatpush.msra.mxu0 0.0
    %263 = vmatpush.msra.mxu0 0.0
    %264 = vmatpush.msra.mxu0 0.0
    %265 = vmatpush.msra.mxu0 %v57
    %266 = vmatpush.msra.mxu0 %v56
    %267 = vmatpush.msra.mxu0 %v55
    %268 = vmatpush.msra.mxu0 %v54
    %269 = vmatmul.f32.gmra.mxu0 %v251
    %v270 = vpop.f32.mrf.mxu0
    %v271 = vadd.f32 %v63, %v270
    %272 = vdwg.mxu0
    %v273 = vtanh.pop %v271
    %v274 = vmul.f32 %v273, %v91
    %v275 = vsel %vm94, %v274, 0.0
    %276 = vadd.xlane.f32.xlu0 %v275
    %v277 = vpop.xlane.xlu0 %276
    %s278 = scalar_lea.vmem [#allocation3], 14
    %v279 = vld [vmem:[%s278] sm:$0x3]
    %v281 = vsel %vm65, %v279, 0
    %283 = vmatpush.msra.mxu0 0.0
    %284 = vmatpush.msra.mxu0 0.0
    %285 = vmatpush.msra.mxu0 0.0
    %286 = vmatpush.msra.mxu0 0.0
    %287 = vmatpush.msra.mxu0 0.0
    %288 = vmatpush.msra.mxu0 0.0
    %289 = vmatpush.msra.mxu0 0.0
    %290 = vmatpush.msra.mxu0 0.0
    %291 = vmatpush.msra.mxu0 0.0
    %292 = vmatpush.msra.mxu0 0.0
    %293 = vmatpush.msra.mxu0 0.0
    %294 = vmatpush.msra.mxu0 0.0
    %295 = vmatpush.msra.mxu0 %v57
    %296 = vmatpush.msra.mxu0 %v56
    %297 = vmatpush.msra.mxu0 %v55
    %298 = vmatpush.msra.mxu0 %v54
    %299 = vmatmul.f32.gmra.mxu0 %v281
    %v300 = vpop.f32.mrf.mxu0
    %v301 = vadd.f32 %v63, %v300
    %302 = vdwg.mxu0
    %v303 = vtanh.pop %v301
    %v304 = vmul.f32 %v303, %v91
    %v305 = vsel %vm94, %v304, 0.0
    %306 = vadd.xlane.f32.xlu0 %v305
    %v307 = vpop.xlane.xlu0 %306
    %vm308 = vcmask 7168
    %v309 = vsel %vm308, %v97, %v127
    %vm310 = vcmask 15360
    %v311 = vsel %vm310, %v309, %v157
    %vm312 = vcmask 23552
    %v313 = vsel %vm312, %v311, %v187
    %vm314 = vcmask 31744
    %v315 = vsel %vm314, %v313, %v217
    %vm316 = vcmask 39936
    %v317 = vsel %vm316, %v315, %v247
    %vm318 = vcmask 48128
    %v319 = vsel %vm318, %v317, %v277
    %vm320 = vcmask 56320
    %v321 = vsel %vm320, %v319, %v307
    %v322 = vstv %s60
    %v323 = vadd.f32 %v321, %v322
    %vm324 = vcmask 58368
    %v325 = vsel %vm324, %v323, -inf
    %326 = vmax.xlane.f32.xlu0 %v325
    %v327 = vpop.xlane.xlu0 %326
    %v328 = vsub.f32 %v323, %v327
    %v329 = vmul.f32 %v328, 1.442695
    %v330 = vpow.pop %v329
    %v331 = vsel %vm324, %v330, 0.0
    %332 = vadd.xlane.f32.xlu0 %v331
    %v333 = vpop.xlane.xlu0 %332
    %v334 = vrcp.pop %v333
    %v335 = vmul.f32 %v333, %v334
    %v336 = vsub.f32 1.0, %v335
    %v337 = vmul.f32 %v334, %v336
    %v338 = vadd.f32 %v334, %v337
    %vm339 = vweird.f32 %v333
    %vm340 = vweird.f32 %v334
    %vm341 = vmor %vm339, %vm340
    %v342 = vsel %vm341, %v334, %v338
    %v343 = vand.u32 2147483647, %v333
    %vm344 = vcmp.eq.f32.partialorder %v343, 8.507059e+37
    %v345 = vand.u32 %v333, 2147483648
    %v346 = vor.u32 1.1754944e-38, %v345
    %v347 = vsel %vm344, %v346, %v342
    %v348 = vmul.f32 %v330, %v347
    %350 = vset.pattern.permute.xlu0 0
    %351 = vperm.xlu0 %350, %v348
    %v352 = vpop.permute.xlu0 %351
    %v354 = vmul.f32 %v352, %v61
    %355 = vset.pattern.permute.xlu0 1
    %356 = vperm.xlu0 %355, %v348
    %v357 = vpop.permute.xlu0 %356
    %v359 = vmul.f32 %v357, %v99
    %v360 = vadd.f32 %v354, %v359
    %361 = vset.pattern.permute.xlu0 2
    %362 = vperm.xlu0 %361, %v348
    %v363 = vpop.permute.xlu0 %362
    %v365 = vmul.f32 %v363, %v129
    %v366 = vadd.f32 %v360, %v365
    %367 = vset.pattern.permute.xlu0 3
    %368 = vperm.xlu0 %367, %v348
    %v369 = vpop.permute.xlu0 %368
    %v371 = vmul.f32 %v369, %v159
    %v372 = vadd.f32 %v366, %v371
    %373 = vset.pattern.permute.xlu0 4
    %374 = vperm.xlu0 %373, %v348
    %v375 = vpop.permute.xlu0 %374
    %v377 = vmul.f32 %v375, %v189
    %v378 = vadd.f32 %v372, %v377
    %379 = vset.pattern.permute.xlu0 5
    %380 = vperm.xlu0 %379, %v348
    %v381 = vpop.permute.xlu0 %380
    %v383 = vmul.f32 %v381, %v219
    %v384 = vadd.f32 %v378, %v383
    %385 = vset.pattern.permute.xlu0 6
    %386 = vperm.xlu0 %385, %v348
    %v387 = vpop.permute.xlu0 %386
    %v389 = vmul.f32 %v387, %v249
    %v390 = vadd.f32 %v384, %v389
    %391 = vset.pattern.permute.xlu0 7
    %392 = vperm.xlu0 %391, %v348
    %v393 = vpop.permute.xlu0 %392
    %v395 = vmul.f32 %v393, %v279
    %v396 = vadd.f32 %v390, %v395
    %397 = vst.msk [vmem:[#allocation8] sm:$0x3] %vm94, %v396
    // Predicated region
    $region30: #{tpu_custom_call.1} parent=1 // pred_check
      _
    $region31: #{tpu_custom_call.1} parent=1 // pred_check_branch
      %399 = sbr.rel (0) target = $region33
    $region32: #{tpu_custom_call.1} parent=1 // pred_region
      %401 = vsyncadd [#allocation5], 0
      %s403 = sshll.u32 [#allocation8], 4
      %s404 = int_to_ptr.vmem [resolvable:$true] %s403
      %s405 = sshll.u32 %s5, 4
      %s406 = int_to_ptr.hbm [resolvable:$true] %s405
      %408 = dma.vmem_to_hbm [thread:$0]  %s404, 32, %s406, [#allocation5]
    $region33: #{tpu_custom_call.1} parent=1 // pred_fallthru
      _
    // Predicated region
    $region34: #{tpu_custom_call.1} parent=1 // pred_check
      _
    $region35: #{tpu_custom_call.1} parent=1 // pred_check_branch
      %410 = sbr.rel (0) target = $region37
    $region36: #{tpu_custom_call.1} parent=1 // pred_region
      %412 = dma.done [#allocation5], 32
    $region37: #{tpu_custom_call.1} parent=1 // pred_fallthru
      _
    %413 = vsyncpa [#allocation4], 1
    %414 = vsyncpa [#allocation7], 1
    %415 = vsyncpa [#allocation5], 1

</llo_original>
